<compile_context>
chip_gen: v7x
topology: tpu7x:2x2x1
jax: 0.10.0
libtpu: 0.0.40
codegen_flags: <defaults>
</compile_context>

<pallas_src>
import math

import jax
import jax.numpy as jnp
from jax.experimental import pallas as pl
from jax.experimental.pallas import tpu as pltpu

_LANE = 128
_SUBLANE = 8


def _gelu_kernel(x_ref, o_ref):
    xf = x_ref[...].astype(jnp.float32)
    c = jnp.float32(math.sqrt(2.0 / math.pi))
    z = c * (xf + jnp.float32(0.044715) * (xf * xf * xf))
    y = jnp.float32(0.5) * xf * (jnp.float32(1.0) + jnp.tanh(z))
    o_ref[...] = y.astype(o_ref.dtype)


def _vmem_capacity_bytes() -> int:
    try:
        return int(pltpu.get_tpu_info().vmem_capacity_bytes)
    except Exception:
        return 64 * 1024 * 1024  # conservative (v7x-class) fallback


def gelu(x: jax.Array, *, lane_width: int = 2048) -> jax.Array:
    """Tanh-approximation GELU (matches the PyTorch module's forward)."""
    orig_shape = x.shape
    dtype = x.dtype
    total = int(x.size)
    if total == 0:
        return x
    itemsize = jnp.dtype(dtype).itemsize

    # Generation-dependent block sizing.
    vmem_cap = _vmem_capacity_bytes()
    small_vmem = vmem_cap <= 64 * 1024 * 1024            # v7x-class (64 MiB/TC)
    if small_vmem:
        target_block_bytes = 10 * 1024 * 1024            # 8-12 MiB sweet spot
        min_grid_steps = 4                               # feed both TCs / pipeline
    else:
        target_block_bytes = 16 * 1024 * 1024            # v5e/v6e: 128 MiB VMEM
        min_grid_steps = 1

    # ---- layout selection (avoid pad/slice whenever possible) ----
    last = orig_shape[-1] if x.ndim >= 1 else 1
    pad = 0
    if (x.ndim >= 2 and last % _LANE == 0
            and last * _SUBLANE * itemsize <= 2 * target_block_bytes):
        # Free reshape; last dim already lane-dense (multiple of 128).
        C = last
        x2d = x.reshape(-1, C)
    elif total % lane_width == 0:
        # Free flatten into wide lane-dense rows.
        C = lane_width
        x2d = x.reshape(-1, C)
    else:
        # Truly ragged: minimal pad to one extra row tail, sliced off after.
        C = lane_width
        rows_r = pl.cdiv(total, C)
        pad = rows_r * C - total
        flat = jnp.pad(x.reshape(-1), (0, pad))
        x2d = flat.reshape(rows_r, C)

    rows = x2d.shape[0]

    # ---- block sizing ----
    block_rows = max(
        _SUBLANE,
        (target_block_bytes // (C * itemsize)) // _SUBLANE * _SUBLANE)
    if min_grid_steps > 1:
        cap = (rows // min_grid_steps) // _SUBLANE * _SUBLANE
        if cap >= _SUBLANE:
            block_rows = min(block_rows, cap)
    block_rows = min(block_rows, rows)
    # Invariant: block_rows is a multiple of 8 OR equals rows (full dim).

    grid = (pl.cdiv(rows, block_rows),)   # partial last block handled by Pallas

    block_bytes = block_rows * C * itemsize
    vmem_limit = 4 * block_bytes + 8 * 1024 * 1024       # 2x in + 2x out + headroom
    vmem_limit = max(vmem_limit, 32 * 1024 * 1024)       # above v5e 16 MiB default
    vmem_limit = min(vmem_limit, vmem_cap - 8 * 1024 * 1024)

    out2d = pl.pallas_call(
        _gelu_kernel,
        out_shape=jax.ShapeDtypeStruct((rows, C), dtype),
        grid_spec=pltpu.PrefetchScalarGridSpec(
            num_scalar_prefetch=0,
            grid=grid,
            in_specs=[pl.BlockSpec((block_rows, C), lambda i: (i, 0))],
            out_specs=pl.BlockSpec((block_rows, C), lambda i: (i, 0)),
        ),
        compiler_params=pltpu.CompilerParams(
            dimension_semantics=("parallel",),
            vmem_limit_bytes=int(vmem_limit),
        ),
    )(x2d)

    if pad:
        return out2d.reshape(-1)[:total].reshape(orig_shape)
    return out2d.reshape(orig_shape)


def _gelu_ref(x):
    c = math.sqrt(2.0 / math.pi)
    return 0.5 * x * (1.0 + jnp.tanh(c * (x + 0.044715 * x**3)))


if __name__ == "__main__":
    key = jax.random.PRNGKey(0)
    # batch=2, seq=8, hidden=32 (GELU has no parameters).
    x = jax.random.normal(key, (2, 8, 32), dtype=jnp.float32)

    y = gelu(x)
    jax.block_until_ready(y)

    y_ref = _gelu_ref(x)
    assert y.shape == x.shape and y.dtype == x.dtype
    assert jnp.allclose(y, y_ref, atol=1e-5, rtol=1e-5)

    # Path 1: trailing dim multiple of 128 (no pad, no copy).
    x2 = jax.random.normal(jax.random.PRNGKey(1), (4, 64, 256), dtype=jnp.float32)
    y2 = gelu(x2)
    jax.block_until_ready(y2)
    assert jnp.allclose(y2, _gelu_ref(x2), atol=1e-5, rtol=1e-5)

    # Path 2: ragged trailing dim but total % 2048 == 0 (free flatten, no pad).
    x3 = jax.random.normal(jax.random.PRNGKey(2), (64, 96), dtype=jnp.float32)
    y3 = gelu(x3)
    jax.block_until_ready(y3)
    assert jnp.allclose(y3, _gelu_ref(x3), atol=1e-5, rtol=1e-5)

    # Path 3: truly ragged (minimal pad + slice).
    x4 = jax.random.normal(jax.random.PRNGKey(3), (3, 37, 517), dtype=jnp.float32)
    y4 = gelu(x4)
    jax.block_until_ready(y4)
    assert jnp.allclose(y4, _gelu_ref(x4), atol=1e-5, rtol=1e-5)

    print("KERNEL_OK")
</pallas_src>

<mosaic_0001>
module attributes {stable_mosaic.version = 11 : i64} {
  func.func @_gelu_kernel(%arg0: i32, %arg1: memref<1x2048xf32, #tpu.memory_space<vmem>>, %arg2: memref<1x2048xf32, #tpu.memory_space<vmem>>) attributes {dimension_semantics = [#tpu.dimension_semantics<parallel>], iteration_bounds = array<i64: 1>, scalar_prefetch = 0 : i64, scratch_operands = 0 : i64, tpu.core_type = #tpu.core_type<tc>, window_params = [{transform_indices = @transform_0, window_bounds = array<i64: 1, 2048>}, {transform_indices = @transform_1, window_bounds = array<i64: 1, 2048>}]} {
    %c0 = arith.constant 0 : index
    %c0_0 = arith.constant 0 : index
    %0 = vector.load %arg1[%c0, %c0_0] : memref<1x2048xf32, #tpu.memory_space<vmem>>, vector<1x2048xf32>
    %1 = arith.mulf %0, %0 : vector<1x2048xf32>
    %2 = arith.mulf %1, %0 : vector<1x2048xf32>
    %cst = arith.constant 4.471500e-02 : f32
    %3 = vector.broadcast %cst : f32 to vector<1x2048xf32>
    %4 = arith.mulf %3, %2 : vector<1x2048xf32>
    %5 = arith.addf %0, %4 : vector<1x2048xf32>
    %cst_1 = arith.constant 0.797884583 : f32
    %6 = vector.broadcast %cst_1 : f32 to vector<1x2048xf32>
    %7 = arith.mulf %6, %5 : vector<1x2048xf32>
    %cst_2 = arith.constant 5.000000e-01 : f32
    %8 = vector.broadcast %cst_2 : f32 to vector<1x2048xf32>
    %9 = arith.mulf %8, %0 : vector<1x2048xf32>
    %10 = math.tanh %7 : vector<1x2048xf32>
    %cst_3 = arith.constant 1.000000e+00 : f32
    %11 = vector.broadcast %cst_3 : f32 to vector<1x2048xf32>
    %12 = arith.addf %11, %10 : vector<1x2048xf32>
    %13 = arith.mulf %9, %12 : vector<1x2048xf32>
    %c0_4 = arith.constant 0 : index
    %c0_5 = arith.constant 0 : index
    %14 = vector.load %arg2[%c0_4, %c0_5] : memref<1x2048xf32, #tpu.memory_space<vmem>>, vector<1x2048xf32>
    tpu.vector_store %arg2[%c0_4, %c0_5], %13 {strides = array<i32>} : memref<1x2048xf32, #tpu.memory_space<vmem>>, vector<1x2048xf32>,
    return
  }
  func.func @transform_0(%arg0: i32) -> (i32, i32) {
    %c0_i32 = arith.constant 0 : i32
    %c0_i32_0 = arith.constant 0 : i32
    return %arg0, %c0_i32 : i32, i32
  }
  func.func @transform_1(%arg0: i32) -> (i32, i32) {
    %c0_i32 = arith.constant 0 : i32
    %c0_i32_0 = arith.constant 0 : i32
    return %arg0, %c0_i32 : i32, i32
  }
}

</mosaic_0001>

<llo_original>
// kernel: tpu_custom_call.1
$region0: #{tpu_custom_call.1}
  #allocation0 [shape = 'u32[]', space=smem, size = 0x4, offset = 0x4, fixed_abs, tag = 'smem constant byte address 0x4 - core index']
  #allocation1 [shape = 'u32[144,128]{1,0:T(1,128)}', space=vmem, size = 0x12000, scoped, tag = 'internal scratch']
  %s0 = inlined_call_operand.hbm [shape: f32[1,2048], index: 0, kind: input, shape index: {}]
  %s1 = inlined_call_operand.hbm [shape: f32[1,2048], index: 1, kind: output, shape index: {}]
  %s2 = sld [smem:[#allocation0]]
  $region18: #{tpu_custom_call.1} parent=0
    _
  %s4 = ssub.s32 1, %s2
  %s5 = scalar_select 0, %s4, %s2
  $region1: #{tpu_custom_call.1} parent=0
    #allocation2 [shape = 'u8[8192]{0}', space=vmem, size = 0x2000, scoped, tag = 'input window, operand 0, single buffered']
    #allocation3 [shape = 's32[1]{0}', space=sflag, size = 0x4, scoped, tag = 'scoped memory for tpu_custom_call.1']
    #allocation4 [shape = 's32[1]{0}', space=sflag, size = 0x4, scoped, tag = 'scoped memory for tpu_custom_call.1']
    #allocation5 [shape = 'u8[8192]{0}', space=vmem, size = 0x2000, scoped, tag = 'output window, operand 0, single buffered']
    %6 = vsyncpa [#allocation3], 0
    %7 = vsyncpa [#allocation4], 0
    // Predicated region
    $region2: #{tpu_custom_call.1} parent=1 // pred_check
      _
    $region3: #{tpu_custom_call.1} parent=1 // pred_check_branch
      %9 = sbr.rel (0) target = $region5
    $region4: #{tpu_custom_call.1} parent=1 // pred_region
      %s11 = ssub.s32 256, 256
      %12 = vsyncadd [#allocation3], %s11
      %s14 = sshll.u32 [#allocation2], 4
      %s15 = int_to_ptr.vmem [resolvable:$true] %s14
      %17 = dma.hbm_to_vmem [thread:$0]  %s0, 256, %s15, [#allocation3]
    $region5: #{tpu_custom_call.1} parent=1 // pred_fallthru
      _
    // Predicated region
    $region6: #{tpu_custom_call.1} parent=1 // pred_check
      _
    $region7: #{tpu_custom_call.1} parent=1 // pred_check_branch
      %19 = sbr.rel (0) target = $region9
    $region8: #{tpu_custom_call.1} parent=1 // pred_region
      %20 = dma.done [#allocation3], 256
    $region9: #{tpu_custom_call.1} parent=1 // pred_fallthru
      _
    %v21 = vld [vmem:[#allocation2] sm:$0xff]
    %v22 = vld [vmem:[#allocation2 + $0x8] sm:$0xff]
    %v23 = vmul.f32 %v21, %v21
    %v24 = vmul.f32 %v22, %v22
    %v25 = vmul.f32 %v23, %v21
    %v26 = vmul.f32 %v24, %v22
    %v27 = vmul.f32 %v25, 0.044715
    %v28 = vmul.f32 %v26, 0.044715
    %v29 = vadd.f32 %v21, %v27
    %v30 = vadd.f32 %v22, %v28
    %v31 = vmul.f32 %v29, 0.7978846
    %v32 = vmul.f32 %v30, 0.7978846
    %v33 = vmul.f32 %v21, 0.5
    %v34 = vmul.f32 %v22, 0.5
    %v35 = vtanh.pop %v31
    %v36 = vtanh.pop %v32
    %v37 = vadd.f32 %v35, 1.0
    %v38 = vadd.f32 %v36, 1.0
    %v39 = vmul.f32 %v33, %v37
    %v40 = vmul.f32 %v34, %v38
    %41 = vst [vmem:[#allocation5] sm:$0xff] %v39
    %42 = vst [vmem:[#allocation5 + $0x8] sm:$0xff] %v40
    // Predicated region
    $region10: #{tpu_custom_call.1} parent=1 // pred_check
      _
    $region11: #{tpu_custom_call.1} parent=1 // pred_check_branch
      %44 = sbr.rel (0) target = $region13
    $region12: #{tpu_custom_call.1} parent=1 // pred_region
      %s46 = ssub.s32 256, 256
      %47 = vsyncadd [#allocation4], %s46
      %s49 = sshll.u32 [#allocation5], 4
      %s50 = int_to_ptr.vmem [resolvable:$true] %s49
      %52 = dma.vmem_to_hbm [thread:$0]  %s50, 256, %s1, [#allocation4]
    $region13: #{tpu_custom_call.1} parent=1 // pred_fallthru
      _
    // Predicated region
    $region14: #{tpu_custom_call.1} parent=1 // pred_check
      _
    $region15: #{tpu_custom_call.1} parent=1 // pred_check_branch
      %54 = sbr.rel (0) target = $region17
    $region16: #{tpu_custom_call.1} parent=1 // pred_region
      %55 = dma.done [#allocation4], 256
    $region17: #{tpu_custom_call.1} parent=1 // pred_fallthru
      _
    %56 = vsyncpa [#allocation3], 1
    %57 = vsyncpa [#allocation4], 1

</llo_original>
